<compile_context>
chip_gen: v7x
topology: tpu7x:2x2x1
jax: 0.10.0
libtpu: 0.0.40
codegen_flags: <defaults>
</compile_context>

<pallas_src>
import numpy as np

import jax
import jax.numpy as jnp
from jax.experimental import pallas as pl
from jax.experimental.pallas import tpu as pltpu

INV_SQRT2 = 0.7071067811865476
LANES = 128
SLAB = 8 * LANES  # pad P to a multiple of 1024 so rows % 8 == 0


def make_model_kernel(w1, b1, w3_half, b3):
    """Build a kernel with the (tiny) conv weights baked in as immediates.

    w1, b1   : length-3 lists of Python floats        (conv1: Cin=1 -> Cout=3)
    w3_half  : 3x6 nested list of Python floats        (0.5 * conv3 weights, (Cin, Cout))
    b3       : length-6 list of Python floats          (conv3 bias)
    """

    def kernel(x_ref, out_ref):
        # x_ref:  (rows, 128) f32 in VMEM  -- lane-dense pixel slab
        # out_ref:(6, rows, 128) f32 in VMEM -- channel-major output
        x = x_ref[...]

        # conv(1 -> 3) + erf-GELU, with the GELU 0.5 factor folded into w3:
        #   g_j = v1_j * (erf(v1_j / sqrt(2)) + 1)   (== 2 * GELU(v1_j))
        g = []
        for j in range(3):
            v1 = x * w1[j] + b1[j]
            g.append(v1 * (jax.lax.erf(v1 * INV_SQRT2) + 1.0))

        # conv3 (3 -> 6): scalar*slab FMAs on the VPU, weights pre-scaled by 0.5.
        for k in range(6):
            acc = g[0] * w3_half[0][k]
            acc = acc + g[1] * w3_half[1][k]
            acc = acc + g[2] * w3_half[2][k]
            out_ref[k, :, :] = acc + b3[k]

    return kernel


def make_model_forward(params):
    """Returns a jitted forward: (N, 1, H, W) f32 -> (N, 6, H, W) f32.

    Weight layout convention here is (Cin, Cout) for the 1x1 kernels; a real
    PyTorch Conv2d checkpoint stores (Cout, Cin, 1, 1) and must be transposed
    before use.
    """
    w1, b1, _w2, _b2, w3, b3 = params

    # Bake weights as host-side Python floats (inference-time constants).
    w1l = [float(v) for v in np.asarray(w1, dtype=np.float64).reshape(-1)]       # (3,)
    b1l = [float(v) for v in np.asarray(b1, dtype=np.float64).reshape(-1)]       # (3,)
    w3h = 0.5 * np.asarray(w3, dtype=np.float64).reshape(3, 6)                   # GELU 0.5 folded in
    w3l = [[float(w3h[i, k]) for k in range(6)] for i in range(3)]
    b3l = [float(v) for v in np.asarray(b3, dtype=np.float64).reshape(-1)]       # (6,)

    kernel = make_model_kernel(w1l, b1l, w3l, b3l)
    vmem = pl.BlockSpec(memory_space=pltpu.MemorySpace.VMEM)

    @jax.jit
    def forward(x_nchw):
        n, c, h, w = x_nchw.shape
        assert c == 1, "model expects a single input channel"
        p = n * h * w
        p_pad = ((p + SLAB - 1) // SLAB) * SLAB      # multiple of 1024 -> rows % 8 == 0
        rows = p_pad // LANES

        # NCHW with C=1 flattens directly to pixel order (n, h, w); zero-pad.
        x_flat = x_nchw.reshape(p)
        x_flat = jnp.pad(x_flat, (0, p_pad - p))
        x_slab = x_flat.reshape(rows, LANES).astype(jnp.float32)

        # Advisory cost so XLA doesn't assume a default-large custom-call cost.
        cost = pl.CostEstimate(
            flops=50 * p_pad,                 # 3x(mul+add) conv1 + GELU muls + 6x3 FMA conv3
            transcendentals=3 * p_pad,        # one erf per pixel per conv1 channel
            bytes_accessed=4 * (p_pad + 6 * p_pad),
        )

        # Single grid point, no pipelining: the whole problem is a few KB, so the
        # kernel is launch-overhead-bound and any grid/pipeline structure is cost.
        out_slab = pl.pallas_call(
            kernel,
            out_shape=jax.ShapeDtypeStruct((6, rows, LANES), jnp.float32),
            in_specs=[vmem],
            out_specs=vmem,
            cost_estimate=cost,
        )(x_slab)

        out = out_slab.reshape(6, p_pad)[:, :p]       # drop zero-padded pixels
        out = out.reshape(6, n, h, w)
        return jnp.transpose(out, (1, 0, 2, 3))        # (N, 6, H, W)

    return forward


def reference_forward(x_nchw, params):
    """Pure-JAX reference with the same interpretation (conv1 -> erf-GELU -> conv3)."""
    w1, b1, _w2, _b2, w3, b3 = params
    x = x_nchw[:, 0]                                               # (N, H, W)
    v1 = x[:, None, :, :] * w1.reshape(1, 3, 1, 1) + b1.reshape(1, 3, 1, 1)
    g = 0.5 * v1 * (jax.lax.erf(v1 * INV_SQRT2) + 1.0)             # erf-GELU
    out = jnp.einsum("nchw,cd->ndhw", g, w3) + b3.reshape(1, 6, 1, 1)
    return out


def init_params(key):
    """Deterministic params matching Conv2d(1,3,1), Conv2d(3,6,1), Conv2d(3,6,1).

    Weights stored as (Cin, Cout) matrices (1x1 kernels), biases as (Cout,).
    PyTorch-style uniform(-1/sqrt(fan_in), 1/sqrt(fan_in)) init.
    """
    ks = jax.random.split(key, 6)

    def conv_init(kw, kb, cin, cout):
        bound = 1.0 / float(np.sqrt(cin))
        wgt = jax.random.uniform(kw, (cin, cout), jnp.float32, -bound, bound)
        bias = jax.random.uniform(kb, (cout,), jnp.float32, -bound, bound)
        return wgt, bias

    w1, b1 = conv_init(ks[0], ks[1], 1, 3)
    w2, b2 = conv_init(ks[2], ks[3], 3, 6)   # present in the module; dead in forward
    w3, b3 = conv_init(ks[4], ks[5], 3, 6)
    return (w1, b1, w2, b2, w3, b3)


if __name__ == "__main__":
    key = jax.random.PRNGKey(0)
    k_x, k_p = jax.random.split(key)

    # Same shape as the reference script: x1 = torch.randn(1, 1, 55, 28)
    x1 = jax.random.normal(k_x, (1, 1, 55, 28), jnp.float32)
    params = init_params(k_p)

    forward = make_model_forward(params)
    out = forward(x1)
    jax.block_until_ready(out)

    assert out.shape == (1, 6, 55, 28), out.shape
    assert out.dtype == jnp.float32

    ref = reference_forward(x1, params)
    assert jnp.allclose(out, ref, atol=1e-5, rtol=1e-5), float(jnp.max(jnp.abs(out - ref)))

    print("KERNEL_OK")
</pallas_src>

<mosaic_0001>
module attributes {stable_mosaic.version = 11 : i64} {
  func.func @kernel(%arg0: memref<16x128xf32, #tpu.memory_space<vmem>>, %arg1: memref<6x16x128xf32, #tpu.memory_space<vmem>>) attributes {dimension_semantics = [], scalar_prefetch = 0 : i64, scratch_operands = 0 : i64, tpu.core_type = #tpu.core_type<tc>} {
    %c0 = arith.constant 0 : index
    %c0_0 = arith.constant 0 : index
    %0 = vector.load %arg0[%c0, %c0_0] : memref<16x128xf32, #tpu.memory_space<vmem>>, vector<16x128xf32>
    %cst = arith.constant 0.157664776 : f32
    %1 = vector.broadcast %cst : f32 to vector<16x128xf32>
    %2 = arith.mulf %0, %1 : vector<16x128xf32>
    %cst_1 = arith.constant -0.818328142 : f32
    %3 = vector.broadcast %cst_1 : f32 to vector<16x128xf32>
    %4 = arith.addf %2, %3 : vector<16x128xf32>
    %cst_2 = arith.constant 0.707106769 : f32
    %5 = vector.broadcast %cst_2 : f32 to vector<16x128xf32>
    %6 = arith.mulf %4, %5 : vector<16x128xf32>
    %7 = math.erf %6 : vector<16x128xf32>
    %cst_3 = arith.constant 1.000000e+00 : f32
    %8 = vector.broadcast %cst_3 : f32 to vector<16x128xf32>
    %9 = arith.addf %7, %8 : vector<16x128xf32>
    %10 = arith.mulf %4, %9 : vector<16x128xf32>
    %cst_4 = arith.constant -0.558805227 : f32
    %11 = vector.broadcast %cst_4 : f32 to vector<16x128xf32>
    %12 = arith.mulf %0, %11 : vector<16x128xf32>
    %cst_5 = arith.constant -0.275583982 : f32
    %13 = vector.broadcast %cst_5 : f32 to vector<16x128xf32>
    %14 = arith.addf %12, %13 : vector<16x128xf32>
    %cst_6 = arith.constant 0.707106769 : f32
    %15 = vector.broadcast %cst_6 : f32 to vector<16x128xf32>
    %16 = arith.mulf %14, %15 : vector<16x128xf32>
    %17 = math.erf %16 : vector<16x128xf32>
    %cst_7 = arith.constant 1.000000e+00 : f32
    %18 = vector.broadcast %cst_7 : f32 to vector<16x128xf32>
    %19 = arith.addf %17, %18 : vector<16x128xf32>
    %20 = arith.mulf %14, %19 : vector<16x128xf32>
    %cst_8 = arith.constant -0.791873217 : f32
    %21 = vector.broadcast %cst_8 : f32 to vector<16x128xf32>
    %22 = arith.mulf %0, %21 : vector<16x128xf32>
    %cst_9 = arith.constant 0.243213892 : f32
    %23 = vector.broadcast %cst_9 : f32 to vector<16x128xf32>
    %24 = arith.addf %22, %23 : vector<16x128xf32>
    %cst_10 = arith.constant 0.707106769 : f32
    %25 = vector.broadcast %cst_10 : f32 to vector<16x128xf32>
    %26 = arith.mulf %24, %25 : vector<16x128xf32>
    %27 = math.erf %26 : vector<16x128xf32>
    %cst_11 = arith.constant 1.000000e+00 : f32
    %28 = vector.broadcast %cst_11 : f32 to vector<16x128xf32>
    %29 = arith.addf %27, %28 : vector<16x128xf32>
    %30 = arith.mulf %24, %29 : vector<16x128xf32>
    %cst_12 = arith.constant 1.488850e-01 : f32
    %31 = vector.broadcast %cst_12 : f32 to vector<16x128xf32>
    %32 = arith.mulf %10, %31 : vector<16x128xf32>
    %cst_13 = arith.constant -0.281373233 : f32
    %33 = vector.broadcast %cst_13 : f32 to vector<16x128xf32>
    %34 = arith.mulf %20, %33 : vector<16x128xf32>
    %35 = arith.addf %32, %34 : vector<16x128xf32>
    %cst_14 = arith.constant -0.00283485418 : f32
    %36 = vector.broadcast %cst_14 : f32 to vector<16x128xf32>
    %37 = arith.mulf %30, %36 : vector<16x128xf32>
    %38 = arith.addf %35, %37 : vector<16x128xf32>
    %cst_15 = arith.constant 0.317790389 : f32
    %39 = vector.broadcast %cst_15 : f32 to vector<16x128xf32>
    %40 = arith.addf %38, %39 : vector<16x128xf32>
    %c0_16 = arith.constant 0 : index
    %c0_17 = arith.constant 0 : index
    %c0_18 = arith.constant 0 : index
    %41 = vector.load %arg1[%c0_16, %c0_17, %c0_18] : memref<6x16x128xf32, #tpu.memory_space<vmem>>, vector<1x16x128xf32>
    %42 = vector.shape_cast %41 : vector<1x16x128xf32> to vector<16x128xf32>
    %43 = vector.shape_cast %40 : vector<16x128xf32> to vector<1x16x128xf32>
    tpu.vector_store %arg1[%c0_16, %c0_17, %c0_18], %43 {strides = array<i32>} : memref<6x16x128xf32, #tpu.memory_space<vmem>>, vector<1x16x128xf32>,
    %cst_19 = arith.constant -0.200548947 : f32
    %44 = vector.broadcast %cst_19 : f32 to vector<16x128xf32>
    %45 = arith.mulf %10, %44 : vector<16x128xf32>
    %cst_20 = arith.constant -0.00115530507 : f32
    %46 = vector.broadcast %cst_20 : f32 to vector<16x128xf32>
    %47 = arith.mulf %20, %46 : vector<16x128xf32>
    %48 = arith.addf %45, %47 : vector<16x128xf32>
    %cst_21 = arith.constant -0.0442502648 : f32
    %49 = vector.broadcast %cst_21 : f32 to vector<16x128xf32>
    %50 = arith.mulf %30, %49 : vector<16x128xf32>
    %51 = arith.addf %48, %50 : vector<16x128xf32>
    %cst_22 = arith.constant -0.26077038 : f32
    %52 = vector.broadcast %cst_22 : f32 to vector<16x128xf32>
    %53 = arith.addf %51, %52 : vector<16x128xf32>
    %c1 = arith.constant 1 : index
    %c0_23 = arith.constant 0 : index
    %c0_24 = arith.constant 0 : index
    %54 = vector.load %arg1[%c1, %c0_23, %c0_24] : memref<6x16x128xf32, #tpu.memory_space<vmem>>, vector<1x16x128xf32>
    %55 = vector.shape_cast %54 : vector<1x16x128xf32> to vector<16x128xf32>
    %56 = vector.shape_cast %53 : vector<16x128xf32> to vector<1x16x128xf32>
    tpu.vector_store %arg1[%c1, %c0_23, %c0_24], %56 {strides = array<i32>} : memref<6x16x128xf32, #tpu.memory_space<vmem>>, vector<1x16x128xf32>,
    %cst_25 = arith.constant 0.108173333 : f32
    %57 = vector.broadcast %cst_25 : f32 to vector<16x128xf32>
    %58 = arith.mulf %10, %57 : vector<16x128xf32>
    %cst_26 = arith.constant 0.22377342 : f32
    %59 = vector.broadcast %cst_26 : f32 to vector<16x128xf32>
    %60 = arith.mulf %20, %59 : vector<16x128xf32>
    %61 = arith.addf %58, %60 : vector<16x128xf32>
    %cst_27 = arith.constant -0.0953629836 : f32
    %62 = vector.broadcast %cst_27 : f32 to vector<16x128xf32>
    %63 = arith.mulf %30, %62 : vector<16x128xf32>
    %64 = arith.addf %61, %63 : vector<16x128xf32>
    %cst_28 = arith.constant 5.147830e-01 : f32
    %65 = vector.broadcast %cst_28 : f32 to vector<16x128xf32>
    %66 = arith.addf %64, %65 : vector<16x128xf32>
    %c2 = arith.constant 2 : index
    %c0_29 = arith.constant 0 : index
    %c0_30 = arith.constant 0 : index
    %67 = vector.load %arg1[%c2, %c0_29, %c0_30] : memref<6x16x128xf32, #tpu.memory_space<vmem>>, vector<1x16x128xf32>
    %68 = vector.shape_cast %67 : vector<1x16x128xf32> to vector<16x128xf32>
    %69 = vector.shape_cast %66 : vector<16x128xf32> to vector<1x16x128xf32>
    tpu.vector_store %arg1[%c2, %c0_29, %c0_30], %69 {strides = array<i32>} : memref<6x16x128xf32, #tpu.memory_space<vmem>>, vector<1x16x128xf32>,
    %cst_31 = arith.constant -4.259040e-02 : f32
    %70 = vector.broadcast %cst_31 : f32 to vector<16x128xf32>
    %71 = arith.mulf %10, %70 : vector<16x128xf32>
    %cst_32 = arith.constant 0.150213748 : f32
    %72 = vector.broadcast %cst_32 : f32 to vector<16x128xf32>
    %73 = arith.mulf %20, %72 : vector<16x128xf32>
    %74 = arith.addf %71, %73 : vector<16x128xf32>
    %cst_33 = arith.constant 0.255984932 : f32
    %75 = vector.broadcast %cst_33 : f32 to vector<16x128xf32>
    %76 = arith.mulf %30, %75 : vector<16x128xf32>
    %77 = arith.addf %74, %76 : vector<16x128xf32>
    %cst_34 = arith.constant 0.54245311 : f32
    %78 = vector.broadcast %cst_34 : f32 to vector<16x128xf32>
    %79 = arith.addf %77, %78 : vector<16x128xf32>
    %c3 = arith.constant 3 : index
    %c0_35 = arith.constant 0 : index
    %c0_36 = arith.constant 0 : index
    %80 = vector.load %arg1[%c3, %c0_35, %c0_36] : memref<6x16x128xf32, #tpu.memory_space<vmem>>, vector<1x16x128xf32>
    %81 = vector.shape_cast %80 : vector<1x16x128xf32> to vector<16x128xf32>
    %82 = vector.shape_cast %79 : vector<16x128xf32> to vector<1x16x128xf32>
    tpu.vector_store %arg1[%c3, %c0_35, %c0_36], %82 {strides = array<i32>} : memref<6x16x128xf32, #tpu.memory_space<vmem>>, vector<1x16x128xf32>,
    %cst_37 = arith.constant 0.0217871293 : f32
    %83 = vector.broadcast %cst_37 : f32 to vector<16x128xf32>
    %84 = arith.mulf %10, %83 : vector<16x128xf32>
    %cst_38 = arith.constant 0.103078805 : f32
    %85 = vector.broadcast %cst_38 : f32 to vector<16x128xf32>
    %86 = arith.mulf %20, %85 : vector<16x128xf32>
    %87 = arith.addf %84, %86 : vector<16x128xf32>
    %cst_39 = arith.constant 0.0121304281 : f32
    %88 = vector.broadcast %cst_39 : f32 to vector<16x128xf32>
    %89 = arith.mulf %30, %88 : vector<16x128xf32>
    %90 = arith.addf %87, %89 : vector<16x128xf32>
    %cst_40 = arith.constant 0.00901449099 : f32
    %91 = vector.broadcast %cst_40 : f32 to vector<16x128xf32>
    %92 = arith.addf %90, %91 : vector<16x128xf32>
    %c4 = arith.constant 4 : index
    %c0_41 = arith.constant 0 : index
    %c0_42 = arith.constant 0 : index
    %93 = vector.load %arg1[%c4, %c0_41, %c0_42] : memref<6x16x128xf32, #tpu.memory_space<vmem>>, vector<1x16x128xf32>
    %94 = vector.shape_cast %93 : vector<1x16x128xf32> to vector<16x128xf32>
    %95 = vector.shape_cast %92 : vector<16x128xf32> to vector<1x16x128xf32>
    tpu.vector_store %arg1[%c4, %c0_41, %c0_42], %95 {strides = array<i32>} : memref<6x16x128xf32, #tpu.memory_space<vmem>>, vector<1x16x128xf32>,
    %cst_43 = arith.constant -0.150552377 : f32
    %96 = vector.broadcast %cst_43 : f32 to vector<16x128xf32>
    %97 = arith.mulf %10, %96 : vector<16x128xf32>
    %cst_44 = arith.constant 0.171258256 : f32
    %98 = vector.broadcast %cst_44 : f32 to vector<16x128xf32>
    %99 = arith.mulf %20, %98 : vector<16x128xf32>
    %100 = arith.addf %97, %99 : vector<16x128xf32>
    %cst_45 = arith.constant -0.095460847 : f32
    %101 = vector.broadcast %cst_45 : f32 to vector<16x128xf32>
    %102 = arith.mulf %30, %101 : vector<16x128xf32>
    %103 = arith.addf %100, %102 : vector<16x128xf32>
    %cst_46 = arith.constant 5.442660e-01 : f32
    %104 = vector.broadcast %cst_46 : f32 to vector<16x128xf32>
    %105 = arith.addf %103, %104 : vector<16x128xf32>
    %c5 = arith.constant 5 : index
    %c0_47 = arith.constant 0 : index
    %c0_48 = arith.constant 0 : index
    %106 = vector.load %arg1[%c5, %c0_47, %c0_48] : memref<6x16x128xf32, #tpu.memory_space<vmem>>, vector<1x16x128xf32>
    %107 = vector.shape_cast %106 : vector<1x16x128xf32> to vector<16x128xf32>
    %108 = vector.shape_cast %105 : vector<16x128xf32> to vector<1x16x128xf32>
    tpu.vector_store %arg1[%c5, %c0_47, %c0_48], %108 {strides = array<i32>} : memref<6x16x128xf32, #tpu.memory_space<vmem>>, vector<1x16x128xf32>,
    return
  }
}

</mosaic_0001>

<llo_original>
// kernel: forward.1
$region0: #{forward.1}
  #allocation0 [shape = 'u32[]', space=smem, size = 0x4, offset = 0x4, fixed_abs, tag = 'smem constant byte address 0x4 - core index']
  #allocation1 [shape = 'u32[144,128]{1,0:T(1,128)}', space=vmem, size = 0x12000, scoped, tag = 'internal scratch']
  %s0 = inlined_call_operand.vmem [shape: f32[16,128], index: 0, kind: input, shape index: {}]
  %s1 = inlined_call_operand.vmem [shape: f32[6,16,128], index: 1, kind: output, shape index: {}]
  %s2 = sld [smem:[#allocation0]]
  $region14: #{forward.1} parent=0
    _
  %s4 = ssub.s32 1, %s2
  %s5 = scalar_select 0, %s4, %s2
  // Predicated region
  $region2: #{forward.1} parent=0 // pred_check
    _
  $region3: #{forward.1} parent=0 // pred_check_branch
    %7 = sbr.rel (0) target = $region5
  $region4: #{forward.1} parent=0 // pred_region
    _
  $region5: #{forward.1} parent=0 // pred_fallthru
    _
  %v8 = vld [vmem:[%s0] sm:$0xff]
  %v9 = vld [vmem:[%s0 + $0x8] sm:$0xff]
  %v10 = vmul.f32 %v8, 0.15766478
  %v11 = vmul.f32 %v9, 0.15766478
  %v12 = vadd.f32 %v10, -0.81832814
  %v13 = vadd.f32 %v11, -0.81832814
  %v14 = vmul.f32 %v12, 0.70710677
  %v15 = vmul.f32 %v13, 0.70710677
  %v16 = verf.f32.pop %v14
  %v17 = verf.f32.pop %v15
  %v18 = vadd.f32 %v16, 1.0
  %v19 = vadd.f32 %v17, 1.0
  %v20 = vmul.f32 %v12, %v18
  %v21 = vmul.f32 %v13, %v19
  %v22 = vmul.f32 %v8, -0.5588052
  %v23 = vmul.f32 %v9, -0.5588052
  %v24 = vadd.f32 %v22, -0.27558398
  %v25 = vadd.f32 %v23, -0.27558398
  %v26 = vmul.f32 %v24, 0.70710677
  %v27 = vmul.f32 %v25, 0.70710677
  %v28 = verf.f32.pop %v26
  %v29 = verf.f32.pop %v27
  %v30 = vadd.f32 %v28, 1.0
  %v31 = vadd.f32 %v29, 1.0
  %v32 = vmul.f32 %v24, %v30
  %v33 = vmul.f32 %v25, %v31
  %v34 = vmul.f32 %v8, -0.7918732
  %v35 = vmul.f32 %v9, -0.7918732
  %v36 = vadd.f32 %v34, 0.24321389
  %v37 = vadd.f32 %v35, 0.24321389
  %v38 = vmul.f32 %v36, 0.70710677
  %v39 = vmul.f32 %v37, 0.70710677
  %v40 = verf.f32.pop %v38
  %v41 = verf.f32.pop %v39
  %v42 = vadd.f32 %v40, 1.0
  %v43 = vadd.f32 %v41, 1.0
  %v44 = vmul.f32 %v36, %v42
  %v45 = vmul.f32 %v37, %v43
  %v46 = vmul.f32 %v20, 0.148885
  %v47 = vmul.f32 %v21, 0.148885
  %v48 = vmul.f32 %v32, -0.28137323
  %v49 = vmul.f32 %v33, -0.28137323
  %v50 = vadd.f32 %v46, %v48
  %v51 = vadd.f32 %v47, %v49
  %v52 = vmul.f32 %v44, -0.0028348542
  %v53 = vmul.f32 %v45, -0.0028348542
  %v54 = vadd.f32 %v50, %v52
  %v55 = vadd.f32 %v51, %v53
  %v56 = vadd.f32 %v54, 0.3177904
  %v57 = vadd.f32 %v55, 0.3177904
  %58 = vst [vmem:[%s1] sm:$0xff] %v56
  %59 = vst [vmem:[%s1 + $0x8] sm:$0xff] %v57
  %v60 = vmul.f32 %v20, -0.20054895
  %v61 = vmul.f32 %v21, -0.20054895
  %v62 = vmul.f32 %v32, -0.0011553051
  %v63 = vmul.f32 %v33, -0.0011553051
  %v64 = vadd.f32 %v60, %v62
  %v65 = vadd.f32 %v61, %v63
  %v66 = vmul.f32 %v44, -0.044250265
  %v67 = vmul.f32 %v45, -0.044250265
  %v68 = vadd.f32 %v64, %v66
  %v69 = vadd.f32 %v65, %v67
  %v70 = vadd.f32 %v68, -0.26077038
  %v71 = vadd.f32 %v69, -0.26077038
  %s72 = scalar_lea.vmem %s1, 16
  %73 = vst [vmem:[%s72] sm:$0xff] %v70
  %74 = vst [vmem:[%s72 + $0x8] sm:$0xff] %v71
  %v75 = vmul.f32 %v20, 0.10817333
  %v76 = vmul.f32 %v21, 0.10817333
  %v77 = vmul.f32 %v32, 0.22377342
  %v78 = vmul.f32 %v33, 0.22377342
  %v79 = vadd.f32 %v75, %v77
  %v80 = vadd.f32 %v76, %v78
  %v81 = vmul.f32 %v44, -0.09536298
  %v82 = vmul.f32 %v45, -0.09536298
  %v83 = vadd.f32 %v79, %v81
  %v84 = vadd.f32 %v80, %v82
  %v85 = vadd.f32 %v83, 0.514783
  %v86 = vadd.f32 %v84, 0.514783
  %s87 = scalar_lea.vmem %s1, 32
  %88 = vst [vmem:[%s87] sm:$0xff] %v85
  %89 = vst [vmem:[%s87 + $0x8] sm:$0xff] %v86
  %v90 = vmul.f32 %v20, -0.0425904
  %v91 = vmul.f32 %v21, -0.0425904
  %v92 = vmul.f32 %v32, 0.15021375
  %v93 = vmul.f32 %v33, 0.15021375
  %v94 = vadd.f32 %v90, %v92
  %v95 = vadd.f32 %v91, %v93
  %v96 = vmul.f32 %v44, 0.25598493
  %v97 = vmul.f32 %v45, 0.25598493
  %v98 = vadd.f32 %v94, %v96
  %v99 = vadd.f32 %v95, %v97
  %v100 = vadd.f32 %v98, 0.5424531
  %v101 = vadd.f32 %v99, 0.5424531
  %s102 = scalar_lea.vmem %s1, 48
  %103 = vst [vmem:[%s102] sm:$0xff] %v100
  %104 = vst [vmem:[%s102 + $0x8] sm:$0xff] %v101
  %v105 = vmul.f32 %v20, 0.02178713
  %v106 = vmul.f32 %v21, 0.02178713
  %v107 = vmul.f32 %v32, 0.103078805
  %v108 = vmul.f32 %v33, 0.103078805
  %v109 = vadd.f32 %v105, %v107
  %v110 = vadd.f32 %v106, %v108
  %v111 = vmul.f32 %v44, 0.012130428
  %v112 = vmul.f32 %v45, 0.012130428
  %v113 = vadd.f32 %v109, %v111
  %v114 = vadd.f32 %v110, %v112
  %v115 = vadd.f32 %v113, 0.009014491
  %v116 = vadd.f32 %v114, 0.009014491
  %s117 = scalar_lea.vmem %s1, 64
  %118 = vst [vmem:[%s117] sm:$0xff] %v115
  %119 = vst [vmem:[%s117 + $0x8] sm:$0xff] %v116
  %v120 = vmul.f32 %v20, -0.15055238
  %v121 = vmul.f32 %v21, -0.15055238
  %v122 = vmul.f32 %v32, 0.17125826
  %v123 = vmul.f32 %v33, 0.17125826
  %v124 = vadd.f32 %v120, %v122
  %v125 = vadd.f32 %v121, %v123
  %v126 = vmul.f32 %v44, -0.09546085
  %v127 = vmul.f32 %v45, -0.09546085
  %v128 = vadd.f32 %v124, %v126
  %v129 = vadd.f32 %v125, %v127
  %v130 = vadd.f32 %v128, 0.544266
  %v131 = vadd.f32 %v129, 0.544266
  %s132 = scalar_lea.vmem %s1, 80
  %133 = vst [vmem:[%s132] sm:$0xff] %v130
  %134 = vst [vmem:[%s132 + $0x8] sm:$0xff] %v131
  // Predicated region
  $region6: #{forward.1} parent=0 // pred_check
    _
  $region7: #{forward.1} parent=0 // pred_check_branch
    %136 = sbr.rel (0) target = $region9
  $region8: #{forward.1} parent=0 // pred_region
    _
  $region9: #{forward.1} parent=0 // pred_fallthru
    _
  // Predicated region
  $region10: #{forward.1} parent=0 // pred_check
    _
  $region11: #{forward.1} parent=0 // pred_check_branch
    %138 = sbr.rel (0) target = $region13
  $region12: #{forward.1} parent=0 // pred_region
    _
  $region13: #{forward.1} parent=0 // pred_fallthru
    _

</llo_original>
